<compile_context>
chip_gen: v6e
topology: v6e:2x2x1
jax: 0.10.0
libtpu: 0.0.40
codegen_flags: <defaults>
</compile_context>

<pallas_src>
import jax
import jax.numpy as jnp
from jax.experimental import pallas as pl
from jax.experimental.pallas import tpu as pltpu

IN_F, H1, H2, OUT_F = 64, 32, 16, 1


def _round_up(n, m):
    return ((n + m - 1) // m) * m


def mlp_kernel(x_ref, w1_ref, b1_ref, w2_ref, b2_ref, w3_ref, b3_ref, o_ref):
    x = x_ref[...]                                                   # (TB, 64) f32
    # Layer 1: (TB,64) @ (64,32) -> (TB,32), f32 accumulate on the MXU.
    h1 = jnp.dot(x, w1_ref[...], preferred_element_type=jnp.float32)
    h1 = jnp.maximum(h1 + b1_ref[...], 0.0)                          # bias+ReLU on VPU
    # Layer 2: (TB,32) @ (32,16) -> (TB,16).
    h2 = jnp.dot(h1, w2_ref[...], preferred_element_type=jnp.float32)
    h2 = jnp.maximum(h2 + b2_ref[...], 0.0)
    # Layer 3 (single output unit): VPU multiply + cross-lane reduce (XLU)
    # instead of an N=1 MXU pass.
    z = jnp.sum(h2 * w3_ref[...], axis=-1, keepdims=True) + b3_ref[...]  # (TB, 1)
    o_ref[...] = jax.nn.sigmoid(z).astype(o_ref.dtype)


def simple_nn_forward(x, params, tile_b=8192):
    """x: (B, 64) float32. params: torch-layout weights. Returns (B, 1) float32."""
    B = x.shape[0]
    x = x.astype(jnp.float32)

    # Batch tile: multiple of 8 (sublane axis); feature dims are full-array
    # last dims so no 128-lane padding is needed anywhere.
    tb = _round_up(min(tile_b, _round_up(B, 8)), 8)
    b_pad = _round_up(B, tb)
    if b_pad != B:
        x = jnp.zeros((b_pad, IN_F), jnp.float32).at[:B, :].set(x)
    n_tiles = b_pad // tb

    # Torch layout is (out, in); transpose once (tiny, weight-sized) so the
    # kernel does x @ W^T as a plain row-major matmul.
    w1 = params["w1"].T.astype(jnp.float32)              # (64, 32)
    w2 = params["w2"].T.astype(jnp.float32)              # (32, 16)
    w3 = params["w3"].astype(jnp.float32).reshape(1, H2)  # (1, 16)  VPU broadcast row
    b1 = params["b1"].astype(jnp.float32).reshape(1, H1)  # (1, 32)
    b2 = params["b2"].astype(jnp.float32).reshape(1, H2)  # (1, 16)
    b3 = params["b3"].astype(jnp.float32).reshape(1, 1)   # (1, 1)

    # Constant block index: weights/biases stay resident, no re-DMA per tile.
    const = lambda a: pl.BlockSpec(a.shape, lambda i: (0,) * a.ndim)

    out = pl.pallas_call(
        mlp_kernel,
        out_shape=jax.ShapeDtypeStruct((b_pad, OUT_F), jnp.float32),
        grid=(n_tiles,),
        in_specs=[
            pl.BlockSpec((tb, IN_F), lambda i: (i, 0)),   # x streams over batch tiles
            const(w1), const(b1), const(w2), const(b2), const(w3), const(b3),
        ],
        out_specs=pl.BlockSpec((tb, OUT_F), lambda i: (i, 0)),
        compiler_params=pltpu.CompilerParams(
            dimension_semantics=("parallel",)),
    )(x, w1, b1, w2, b2, w3, b3)

    return out[:B]


def init_params(key):
    """Torch-layout params: W is (out_features, in_features), b is (out_features,).
    Mimics nn.Linear default init (uniform +/- 1/sqrt(fan_in))."""
    ks = jax.random.split(key, 6)

    def linear(kw, kb, fan_in, fan_out):
        bound = 1.0 / float(fan_in) ** 0.5
        w = jax.random.uniform(kw, (fan_out, fan_in), jnp.float32, -bound, bound)
        b = jax.random.uniform(kb, (fan_out,), jnp.float32, -bound, bound)
        return w, b

    w1, b1 = linear(ks[0], ks[1], IN_F, H1)
    w2, b2 = linear(ks[2], ks[3], H1, H2)
    w3, b3 = linear(ks[4], ks[5], H2, OUT_F)
    return {"w1": w1, "b1": b1, "w2": w2, "b2": b2, "w3": w3, "b3": b3}


def reference_forward(x, p):
    h1 = jnp.maximum(x @ p["w1"].T + p["b1"], 0.0)
    h2 = jnp.maximum(h1 @ p["w2"].T + p["b2"], 0.0)
    return jax.nn.sigmoid(h2 @ p["w3"].T + p["b3"])


if __name__ == "__main__":
    key = jax.random.PRNGKey(0)
    k_x, k_p = jax.random.split(key)
    params = init_params(k_p)

    # Small primary check (single tile, tb == B == 8).
    B = 8
    x = jax.random.normal(k_x, (B, IN_F), jnp.float32)
    out = jax.block_until_ready(simple_nn_forward(x, params))
    ref = reference_forward(x, params)
    assert out.shape == (B, 1), out.shape
    assert jnp.allclose(out, ref, atol=1e-3, rtol=1e-3), "mismatch vs reference (B=8)"

    # Exercise multi-tile grid + padding-trim path (3 grid steps, B % tile != 0).
    B2 = 300
    x2 = jax.random.normal(jax.random.fold_in(k_x, 1), (B2, IN_F), jnp.float32)
    out2 = jax.block_until_ready(simple_nn_forward(x2, params, tile_b=128))
    ref2 = reference_forward(x2, params)
    assert out2.shape == (B2, 1), out2.shape
    assert jnp.allclose(out2, ref2, atol=1e-3, rtol=1e-3), "mismatch vs reference (B=300)"

    print("KERNEL_OK")
</pallas_src>

<mosaic_0001>
module attributes {stable_mosaic.version = 11 : i64} {
  func.func @mlp_kernel(%arg0: i32, %arg1: memref<8x64xf32, #tpu.memory_space<vmem>>, %arg2: memref<64x32xf32, #tpu.memory_space<vmem>>, %arg3: memref<1x32xf32, #tpu.memory_space<vmem>>, %arg4: memref<32x16xf32, #tpu.memory_space<vmem>>, %arg5: memref<1x16xf32, #tpu.memory_space<vmem>>, %arg6: memref<1x16xf32, #tpu.memory_space<vmem>>, %arg7: memref<1x1xf32, #tpu.memory_space<vmem>>, %arg8: memref<8x1xf32, #tpu.memory_space<vmem>>) attributes {dimension_semantics = [#tpu.dimension_semantics<parallel>], iteration_bounds = array<i64: 1>, scalar_prefetch = 0 : i64, scratch_operands = 0 : i64, tpu.core_type = #tpu.core_type<tc>, window_params = [{transform_indices = @transform_0, window_bounds = array<i64: 8, 64>}, {pipeline_mode = #tpu.pipeline_mode<synchronous>, transform_indices = @transform_1, window_bounds = array<i64: 64, 32>}, {pipeline_mode = #tpu.pipeline_mode<synchronous>, transform_indices = @transform_2, window_bounds = array<i64: 1, 32>}, {pipeline_mode = #tpu.pipeline_mode<synchronous>, transform_indices = @transform_3, window_bounds = array<i64: 32, 16>}, {pipeline_mode = #tpu.pipeline_mode<synchronous>, transform_indices = @transform_4, window_bounds = array<i64: 1, 16>}, {pipeline_mode = #tpu.pipeline_mode<synchronous>, transform_indices = @transform_5, window_bounds = array<i64: 1, 16>}, {pipeline_mode = #tpu.pipeline_mode<synchronous>, transform_indices = @transform_6, window_bounds = array<i64: 1, 1>}, {transform_indices = @transform_7, window_bounds = array<i64: 8, 1>}]} {
    %c0 = arith.constant 0 : index
    %c0_0 = arith.constant 0 : index
    %0 = vector.load %arg1[%c0, %c0_0] : memref<8x64xf32, #tpu.memory_space<vmem>>, vector<8x64xf32>
    %c0_1 = arith.constant 0 : index
    %c0_2 = arith.constant 0 : index
    %1 = vector.load %arg2[%c0_1, %c0_2] : memref<64x32xf32, #tpu.memory_space<vmem>>, vector<64x32xf32>
    %cst = arith.constant dense<0.000000e+00> : vector<8x32xf32>
    %2 = tpu.matmul %0, %1, %cst {dimension_numbers = #tpu.dot_dimension_numbers<[1], [0], [0], [1], [0, 0, 1, 1], [], []>} : vector<8x64xf32>, vector<64x32xf32>, vector<8x32xf32> -> vector<8x32xf32>
    %c0_3 = arith.constant 0 : index
    %c0_4 = arith.constant 0 : index
    %3 = vector.load %arg3[%c0_3, %c0_4] : memref<1x32xf32, #tpu.memory_space<vmem>>, vector<1x32xf32>
    %4 = vector.broadcast %3 : vector<1x32xf32> to vector<8x32xf32>
    %5 = arith.addf %2, %4 : vector<8x32xf32>
    %cst_5 = arith.constant 0.000000e+00 : f32
    %6 = vector.broadcast %cst_5 : f32 to vector<8x32xf32>
    %7 = arith.maximumf %5, %6 : vector<8x32xf32>
    %c0_6 = arith.constant 0 : index
    %c0_7 = arith.constant 0 : index
    %8 = vector.load %arg4[%c0_6, %c0_7] : memref<32x16xf32, #tpu.memory_space<vmem>>, vector<32x16xf32>
    %cst_8 = arith.constant dense<0.000000e+00> : vector<8x16xf32>
    %9 = tpu.matmul %7, %8, %cst_8 {dimension_numbers = #tpu.dot_dimension_numbers<[1], [0], [0], [1], [0, 0, 1, 1], [], []>} : vector<8x32xf32>, vector<32x16xf32>, vector<8x16xf32> -> vector<8x16xf32>
    %c0_9 = arith.constant 0 : index
    %c0_10 = arith.constant 0 : index
    %10 = vector.load %arg5[%c0_9, %c0_10] : memref<1x16xf32, #tpu.memory_space<vmem>>, vector<1x16xf32>
    %11 = vector.broadcast %10 : vector<1x16xf32> to vector<8x16xf32>
    %12 = arith.addf %9, %11 : vector<8x16xf32>
    %cst_11 = arith.constant 0.000000e+00 : f32
    %13 = vector.broadcast %cst_11 : f32 to vector<8x16xf32>
    %14 = arith.maximumf %12, %13 : vector<8x16xf32>
    %c0_12 = arith.constant 0 : index
    %c0_13 = arith.constant 0 : index
    %15 = vector.load %arg6[%c0_12, %c0_13] : memref<1x16xf32, #tpu.memory_space<vmem>>, vector<1x16xf32>
    %16 = vector.broadcast %15 : vector<1x16xf32> to vector<8x16xf32>
    %17 = arith.mulf %14, %16 : vector<8x16xf32>
    %cst_14 = arith.constant dense<0.000000e+00> : vector<8xf32>
    %18 = vector.multi_reduction <add>, %17, %cst_14 [1] : vector<8x16xf32> to vector<8xf32>
    %19 = vector.shape_cast %18 : vector<8xf32> to vector<8x1xf32>
    %c0_15 = arith.constant 0 : index
    %c0_16 = arith.constant 0 : index
    %20 = vector.load %arg7[%c0_15, %c0_16] : memref<1x1xf32, #tpu.memory_space<vmem>>, vector<1x1xf32>
    %21 = vector.broadcast %20 : vector<1x1xf32> to vector<8x1xf32>
    %22 = arith.addf %19, %21 : vector<8x1xf32>
    %23 = arith.negf %22 : vector<8x1xf32>
    %24 = math.exp %23 : vector<8x1xf32>
    %cst_17 = arith.constant 1.000000e+00 : f32
    %25 = vector.broadcast %cst_17 : f32 to vector<8x1xf32>
    %26 = arith.addf %25, %24 : vector<8x1xf32>
    %27 = arith.divf %25, %26 : vector<8x1xf32>
    %c0_18 = arith.constant 0 : index
    %c0_19 = arith.constant 0 : index
    %28 = vector.load %arg8[%c0_18, %c0_19] : memref<8x1xf32, #tpu.memory_space<vmem>>, vector<8x1xf32>
    tpu.vector_store %arg8[%c0_18, %c0_19], %27 {strides = array<i32>} : memref<8x1xf32, #tpu.memory_space<vmem>>, vector<8x1xf32>,
    return
  }
  func.func @transform_0(%arg0: i32) -> (i32, i32) {
    %c0_i32 = arith.constant 0 : i32
    %c0_i32_0 = arith.constant 0 : i32
    return %arg0, %c0_i32 : i32, i32
  }
  func.func @transform_1(%arg0: i32) -> (i32, i32) {
    %c0_i32 = arith.constant 0 : i32
    %c0_i32_0 = arith.constant 0 : i32
    %c0_i32_1 = arith.constant 0 : i32
    return %c0_i32, %c0_i32_0 : i32, i32
  }
  func.func @transform_2(%arg0: i32) -> (i32, i32) {
    %c0_i32 = arith.constant 0 : i32
    %c0_i32_0 = arith.constant 0 : i32
    %c0_i32_1 = arith.constant 0 : i32
    return %c0_i32, %c0_i32_0 : i32, i32
  }
  func.func @transform_3(%arg0: i32) -> (i32, i32) {
    %c0_i32 = arith.constant 0 : i32
    %c0_i32_0 = arith.constant 0 : i32
    %c0_i32_1 = arith.constant 0 : i32
    return %c0_i32, %c0_i32_0 : i32, i32
  }
  func.func @transform_4(%arg0: i32) -> (i32, i32) {
    %c0_i32 = arith.constant 0 : i32
    %c0_i32_0 = arith.constant 0 : i32
    %c0_i32_1 = arith.constant 0 : i32
    return %c0_i32, %c0_i32_0 : i32, i32
  }
  func.func @transform_5(%arg0: i32) -> (i32, i32) {
    %c0_i32 = arith.constant 0 : i32
    %c0_i32_0 = arith.constant 0 : i32
    %c0_i32_1 = arith.constant 0 : i32
    return %c0_i32, %c0_i32_0 : i32, i32
  }
  func.func @transform_6(%arg0: i32) -> (i32, i32) {
    %c0_i32 = arith.constant 0 : i32
    %c0_i32_0 = arith.constant 0 : i32
    %c0_i32_1 = arith.constant 0 : i32
    return %c0_i32, %c0_i32_0 : i32, i32
  }
  func.func @transform_7(%arg0: i32) -> (i32, i32) {
    %c0_i32 = arith.constant 0 : i32
    %c0_i32_0 = arith.constant 0 : i32
    return %arg0, %c0_i32 : i32, i32
  }
}

</mosaic_0001>

<llo_original>
// kernel: tpu_custom_call.1
$region0: #{tpu_custom_call.1}
  #allocation0 [shape = 'u32[]', space=smem, size = 0x4, offset = 0x4, fixed_abs, tag = 'smem constant byte address 0x4 - core index']
  #allocation1 [shape = 'u32[144,128]{1,0:T(1,128)}', space=vmem, size = 0x12000, scoped, tag = 'internal scratch']
  #allocation2 [shape = 'f32[1,1]{1,0:T(1,128)S(1)}', space=vmem, size = 0x200, scoped, tag = 'scoped memory for tpu_custom_call.1']
  %s0 = inlined_call_operand.vmem [shape: f32[8,64], index: 0, kind: input, shape index: {}]
  %s1 = inlined_call_operand.vmem [shape: f32[64,32], index: 1, kind: input, shape index: {}]
  %s2 = inlined_call_operand.vmem [shape: f32[1,32], index: 2, kind: input, shape index: {}]
  %s3 = inlined_call_operand.vmem [shape: f32[32,16], index: 3, kind: input, shape index: {}]
  %s4 = inlined_call_operand.vmem [shape: f32[1,16], index: 4, kind: input, shape index: {}]
  %s5 = inlined_call_operand.vmem [shape: f32[1,16], index: 5, kind: input, shape index: {}]
  %s6 = inlined_call_operand.<no memory space> [shape: f32[1,1], index: 6, kind: input, shape index: {}]
  %s7 = inlined_call_operand.vmem [shape: f32[8,1], index: 7, kind: output, shape index: {}]
  %s8 = sld [smem:[#allocation0]]
  $region38: #{tpu_custom_call.1} parent=0
    _
  %s10 = ssub.s32 1, %s8
  %s11 = scalar_select 0, %s10, %s8
  %v12 = vstv %s6
  %13 = vst [vmem:[#allocation2] sm:$0x1] %v12
  // Predicated region
  $region2: #{tpu_custom_call.1} parent=0 // pred_check
    _
  $region3: #{tpu_custom_call.1} parent=0 // pred_check_branch
    %15 = sbr.rel (0) target = $region5
  $region4: #{tpu_custom_call.1} parent=0 // pred_region
    _
  $region5: #{tpu_custom_call.1} parent=0 // pred_fallthru
    _
  // Predicated region
  $region6: #{tpu_custom_call.1} parent=0 // pred_check
    _
  $region7: #{tpu_custom_call.1} parent=0 // pred_check_branch
    %17 = sbr.rel (0) target = $region9
  $region8: #{tpu_custom_call.1} parent=0 // pred_region
    _
  $region9: #{tpu_custom_call.1} parent=0 // pred_fallthru
    _
  // Predicated region
  $region10: #{tpu_custom_call.1} parent=0 // pred_check
    _
  $region11: #{tpu_custom_call.1} parent=0 // pred_check_branch
    %19 = sbr.rel (0) target = $region13
  $region12: #{tpu_custom_call.1} parent=0 // pred_region
    _
  $region13: #{tpu_custom_call.1} parent=0 // pred_fallthru
    _
  // Predicated region
  $region14: #{tpu_custom_call.1} parent=0 // pred_check
    _
  $region15: #{tpu_custom_call.1} parent=0 // pred_check_branch
    %21 = sbr.rel (0) target = $region17
  $region16: #{tpu_custom_call.1} parent=0 // pred_region
    _
  $region17: #{tpu_custom_call.1} parent=0 // pred_fallthru
    _
  // Predicated region
  $region18: #{tpu_custom_call.1} parent=0 // pred_check
    _
  $region19: #{tpu_custom_call.1} parent=0 // pred_check_branch
    %23 = sbr.rel (0) target = $region21
  $region20: #{tpu_custom_call.1} parent=0 // pred_region
    _
  $region21: #{tpu_custom_call.1} parent=0 // pred_fallthru
    _
  // Predicated region
  $region22: #{tpu_custom_call.1} parent=0 // pred_check
    _
  $region23: #{tpu_custom_call.1} parent=0 // pred_check_branch
    %25 = sbr.rel (0) target = $region25
  $region24: #{tpu_custom_call.1} parent=0 // pred_region
    _
  $region25: #{tpu_custom_call.1} parent=0 // pred_fallthru
    _
  // Predicated region
  $region26: #{tpu_custom_call.1} parent=0 // pred_check
    _
  $region27: #{tpu_custom_call.1} parent=0 // pred_check_branch
    %27 = sbr.rel (0) target = $region29
  $region28: #{tpu_custom_call.1} parent=0 // pred_region
    _
  $region29: #{tpu_custom_call.1} parent=0 // pred_fallthru
    _
  %v28 = vld [vmem:[%s0] sm:$0xff]
  %v29 = vld [vmem:[%s1] sm:$0xff]
  %v30 = vld [vmem:[%s1 + $0x8] sm:$0xff]
  %v31 = vld [vmem:[%s1 + $0x10] sm:$0xff]
  %v32 = vld [vmem:[%s1 + $0x18] sm:$0xff]
  %v33 = vld [vmem:[%s1 + $0x20] sm:$0xff]
  %v34 = vld [vmem:[%s1 + $0x28] sm:$0xff]
  %v35 = vld [vmem:[%s1 + $0x30] sm:$0xff]
  %v36 = vld [vmem:[%s1 + $0x38] sm:$0xff]
  %v37 = vld [vmem:[%s2] sm:$0x1]
  %v39 = vlaneseq
  %v40 = vshrl.u32 %v39, 7
  %v41 = vsub.s32 0, %v40
  %v42 = vrot.slane %v37, %v41
  %vm44 = vcmask 523264
  %v46 = vsel %vm44, %v28, 0
  %48 = vmatprep.subr.mxu0 0.0
  %49 = vmatpush1.msra.mxu0 0.0
  %50 = vmatprep.subr.mxu0 0.0
  %51 = vmatpush1.msra.mxu0 0.0
  %52 = vmatprep.subr.mxu0 0.0
  %53 = vmatpush1.msra.mxu0 0.0
  %54 = vmatprep.subr.mxu0 0.0
  %55 = vmatpush1.msra.mxu0 0.0
  %56 = vmatprep.subr.mxu0 0.0
  %57 = vmatpush1.msra.mxu0 0.0
  %58 = vmatprep.subr.mxu0 0.0
  %59 = vmatpush1.msra.mxu0 0.0
  %60 = vmatprep.subr.mxu0 0.0
  %61 = vmatpush1.msra.mxu0 0.0
  %62 = vmatprep.subr.mxu0 0.0
  %63 = vmatpush1.msra.mxu0 0.0
  %64 = vmatprep.subr.mxu0 0.0
  %65 = vmatpush1.msra.mxu0 %v36
  %66 = vmatprep.subr.mxu0 0.0
  %67 = vmatpush1.msra.mxu0 %v35
  %68 = vmatprep.subr.mxu0 0.0
  %69 = vmatpush1.msra.mxu0 %v34
  %70 = vmatprep.subr.mxu0 0.0
  %71 = vmatpush1.msra.mxu0 %v33
  %72 = vmatprep.subr.mxu0 0.0
  %73 = vmatpush1.msra.mxu0 %v32
  %74 = vmatprep.subr.mxu0 0.0
  %75 = vmatpush1.msra.mxu0 %v31
  %76 = vmatprep.subr.mxu0 0.0
  %77 = vmatpush1.msra.mxu0 %v30
  %78 = vmatprep.subr.mxu0 0.0
  %79 = vmatpush1.msra.mxu0 %v29
  %80 = vmatprep.subr.mxu0 0.0
  %81 = vmatpush2.msra.mxu0 0.0
  %82 = vmatprep.subr.mxu0 0.0
  %83 = vmatpush2.msra.mxu0 0.0
  %84 = vmatprep.subr.mxu0 0.0
  %85 = vmatpush2.msra.mxu0 0.0
  %86 = vmatprep.subr.mxu0 0.0
  %87 = vmatpush2.msra.mxu0 0.0
  %88 = vmatprep.subr.mxu0 0.0
  %89 = vmatpush2.msra.mxu0 0.0
  %90 = vmatprep.subr.mxu0 0.0
  %91 = vmatpush2.msra.mxu0 0.0
  %92 = vmatprep.subr.mxu0 0.0
  %93 = vmatpush2.msra.mxu0 0.0
  %94 = vmatprep.subr.mxu0 0.0
  %95 = vmatpush2.msra.mxu0 0.0
  %96 = vmatprep.subr.mxu0 0.0
  %97 = vmatpush2.msra.mxu0 0.0
  %98 = vmatprep.subr.mxu0 0.0
  %99 = vmatpush2.msra.mxu0 0.0
  %100 = vmatprep.subr.mxu0 0.0
  %101 = vmatpush2.msra.mxu0 0.0
  %102 = vmatprep.subr.mxu0 0.0
  %103 = vmatpush2.msra.mxu0 0.0
  %104 = vmatprep.subr.mxu0 0.0
  %105 = vmatpush2.msra.mxu0 0.0
  %106 = vmatprep.subr.mxu0 0.0
  %107 = vmatpush2.msra.mxu0 0.0
  %108 = vmatprep.subr.mxu0 0.0
  %109 = vmatpush2.msra.mxu0 0.0
  %110 = vmatprep.subr.mxu0 0.0
  %111 = vmatpush2.msra.mxu0 0.0
  %112 = vmatprep.mubr.f32.mxu0 0.0
  %113 = vmatmul.mubr.f32.gmra.mxu0 %v46
  %v114 = vpop.f32.mrf.mxu0
  %v115 = vadd.f32 %v42, %v114
  %v116 = vpop.f32.mrf.mxu0
  %117 = vdwg.mxu0
  %v118 = vmax.f32 %v115, 0.0
  %v119 = vld [vmem:[%s3] sm:$0xff]
  %v120 = vld [vmem:[%s3 + $0x8] sm:$0xff]
  %v121 = vld [vmem:[%s3 + $0x10] sm:$0xff]
  %v122 = vld [vmem:[%s3 + $0x18] sm:$0xff]
  %v123 = vld [vmem:[%s4] sm:$0x1]
  %v125 = vlaneseq
  %v126 = vshrl.u32 %v125, 7
  %v127 = vsub.s32 0, %v126
  %v128 = vrot.slane %v123, %v127
  %vm130 = vcmask 261120
  %v132 = vsel %vm130, %v118, 0
  %134 = vmatprep.subr.mxu0 0.0
  %135 = vmatpush1.msra.mxu0 0.0
  %136 = vmatprep.subr.mxu0 0.0
  %137 = vmatpush1.msra.mxu0 0.0
  %138 = vmatprep.subr.mxu0 0.0
  %139 = vmatpush1.msra.mxu0 0.0
  %140 = vmatprep.subr.mxu0 0.0
  %141 = vmatpush1.msra.mxu0 0.0
  %142 = vmatprep.subr.mxu0 0.0
  %143 = vmatpush1.msra.mxu0 0.0
  %144 = vmatprep.subr.mxu0 0.0
  %145 = vmatpush1.msra.mxu0 0.0
  %146 = vmatprep.subr.mxu0 0.0
  %147 = vmatpush1.msra.mxu0 0.0
  %148 = vmatprep.subr.mxu0 0.0
  %149 = vmatpush1.msra.mxu0 0.0
  %150 = vmatprep.subr.mxu0 0.0
  %151 = vmatpush1.msra.mxu0 0.0
  %152 = vmatprep.subr.mxu0 0.0
  %153 = vmatpush1.msra.mxu0 0.0
  %154 = vmatprep.subr.mxu0 0.0
  %155 = vmatpush1.msra.mxu0 0.0
  %156 = vmatprep.subr.mxu0 0.0
  %157 = vmatpush1.msra.mxu0 0.0
  %158 = vmatprep.subr.mxu0 0.0
  %159 = vmatpush1.msra.mxu0 %v122
  %160 = vmatprep.subr.mxu0 0.0
  %161 = vmatpush1.msra.mxu0 %v121
  %162 = vmatprep.subr.mxu0 0.0
  %163 = vmatpush1.msra.mxu0 %v120
  %164 = vmatprep.subr.mxu0 0.0
  %165 = vmatpush1.msra.mxu0 %v119
  %166 = vmatprep.subr.mxu0 0.0
  %167 = vmatpush2.msra.mxu0 0.0
  %168 = vmatprep.subr.mxu0 0.0
  %169 = vmatpush2.msra.mxu0 0.0
  %170 = vmatprep.subr.mxu0 0.0
  %171 = vmatpush2.msra.mxu0 0.0
  %172 = vmatprep.subr.mxu0 0.0
  %173 = vmatpush2.msra.mxu0 0.0
  %174 = vmatprep.subr.mxu0 0.0
  %175 = vmatpush2.msra.mxu0 0.0
  %176 = vmatprep.subr.mxu0 0.0
  %177 = vmatpush2.msra.mxu0 0.0
  %178 = vmatprep.subr.mxu0 0.0
  %179 = vmatpush2.msra.mxu0 0.0
  %180 = vmatprep.subr.mxu0 0.0
  %181 = vmatpush2.msra.mxu0 0.0
  %182 = vmatprep.subr.mxu0 0.0
  %183 = vmatpush2.msra.mxu0 0.0
  %184 = vmatprep.subr.mxu0 0.0
  %185 = vmatpush2.msra.mxu0 0.0
  %186 = vmatprep.subr.mxu0 0.0
  %187 = vmatpush2.msra.mxu0 0.0
  %188 = vmatprep.subr.mxu0 0.0
  %189 = vmatpush2.msra.mxu0 0.0
  %190 = vmatprep.subr.mxu0 0.0
  %191 = vmatpush2.msra.mxu0 0.0
  %192 = vmatprep.subr.mxu0 0.0
  %193 = vmatpush2.msra.mxu0 0.0
  %194 = vmatprep.subr.mxu0 0.0
  %195 = vmatpush2.msra.mxu0 0.0
  %196 = vmatprep.subr.mxu0 0.0
  %197 = vmatpush2.msra.mxu0 0.0
  %198 = vmatprep.mubr.f32.mxu0 0.0
  %199 = vmatmul.mubr.f32.gmra.mxu0 %v132
  %v200 = vpop.f32.mrf.mxu0
  %v201 = vadd.f32 %v128, %v200
  %v202 = vpop.f32.mrf.mxu0
  %203 = vdwg.mxu0
  %v204 = vmax.f32 %v201, 0.0
  %v205 = vld [vmem:[%s5] sm:$0x1]
  %v207 = vlaneseq
  %v208 = vshrl.u32 %v207, 7
  %v209 = vsub.s32 0, %v208
  %v210 = vrot.slane %v205, %v209
  %v212 = vmul.f32 %v204, %v210
  %vm213 = vcmask 130048
  %v214 = vsel %vm213, %v212, 0.0
  %215 = vadd.xlane.f32.xlu0 %v214
  %v216 = vpop.xlane.xlu0 %215
  %v217 = vld [vmem:[#allocation2] sm:$0x1]
  %v219 = vlaneseq
  %v220 = vshrl.u32 %v219, 7
  %v221 = vsub.s32 0, %v220
  %v222 = vrot.slane %v217, %v221
  %v224 = vadd.f32 %v216, %v222
  %v225 = vxor.u32 %v224, 2147483648
  %v226 = vmul.f32 %v225, 1.442695
  %v227 = vpow.pop %v226
  %v228 = vadd.f32 %v227, 1.0
  %v229 = vrcp.pop %v228
  %v230 = vmul.f32 1.0, %v229
  %vm231 = vcmask 7168
  %232 = vst.msk [vmem:[%s7] sm:$0xff] %vm231, %v230
  // Predicated region
  $region30: #{tpu_custom_call.1} parent=0 // pred_check
    _
  $region31: #{tpu_custom_call.1} parent=0 // pred_check_branch
    %234 = sbr.rel (0) target = $region33
  $region32: #{tpu_custom_call.1} parent=0 // pred_region
    _
  $region33: #{tpu_custom_call.1} parent=0 // pred_fallthru
    _
  // Predicated region
  $region34: #{tpu_custom_call.1} parent=0 // pred_check
    _
  $region35: #{tpu_custom_call.1} parent=0 // pred_check_branch
    %236 = sbr.rel (0) target = $region37
  $region36: #{tpu_custom_call.1} parent=0 // pred_region
    _
  $region37: #{tpu_custom_call.1} parent=0 // pred_fallthru
    _

</llo_original>
